<compile_context>
chip_gen: v7x
topology: tpu7x:2x2x1
jax: 0.10.0
libtpu: 0.0.40
codegen_flags: <defaults>
</compile_context>

<pallas_src>
import functools

import jax
import jax.numpy as jnp
from jax.experimental import pallas as pl
from jax.experimental.pallas import tpu as pltpu


def _round_up(a, m):
    return ((a + m - 1) // m) * m


def _tpu_caps():
    """(vmem_capacity_bytes, num_tensorcores) with conservative fallbacks."""
    vmem = 64 << 20   # smallest current VMEM (v7x) -> safe default
    cores = 1         # v5e / v6e have a single TensorCore
    try:
        info = pltpu.get_tpu_info()
        v = getattr(info, "vmem_capacity_bytes", None)
        if v:
            vmem = int(v)
        for attr in ("num_cores", "core_count", "num_tensorcores",
                     "tensorcore_count", "cores_per_chip"):
            c = getattr(info, attr, None)
            if c:
                cores = int(c)
                break
    except Exception:
        pass
    return vmem, cores


def _int_pow(x, n):
    """x**n for a small static non-negative integer n (VPU multiplies only)."""
    if n == 0:
        return jnp.ones_like(x)
    result = None
    p = x
    while n:
        if n & 1:
            result = p if result is None else result * p
        n >>= 1
        if n:
            p = p * p
    return result


def _asl_kernel(x_ref, y_ref, out_ref, *,
                gamma_neg, gamma_pos, clip, eps, binary_targets,
                num_rows, block_rows, steps, need_row_mask):
    shard = pl.program_id(0)
    step = pl.program_id(1)

    # Per-shard accumulator init: the output block index only depends on the
    # shard axis, so out_ref stays resident across the "arbitrary" step axis.
    @pl.when(step == 0)
    def _():
        out_ref[...] = jnp.zeros_like(out_ref)

    x = x_ref[...].astype(jnp.float32)
    y = y_ref[...].astype(jnp.float32)

    # sigmoid(x) == 0.5 * tanh(0.5 * x) + 0.5  -> a single EUP push.
    xs_pos = 0.5 * jnp.tanh(0.5 * x) + 0.5
    xs_neg = 1.0 - xs_pos
    if clip is not None and clip > 0:
        # xs_neg.add_(clip).clamp_(max=1)
        xs_neg = jnp.minimum(xs_neg + clip, 1.0)

    anti_y = None if binary_targets else 1.0 - y

    if binary_targets:
        # y in {0,1}: y*log(a) + (1-y)*log(b) == log(select(y, a, b)) -> one log.
        pos = y > 0.5
        prob = jnp.where(pos, xs_pos, xs_neg)
        loss = jnp.log(jnp.maximum(prob, eps))
    else:
        loss = (y * jnp.log(jnp.maximum(xs_pos, eps))
                + anti_y * jnp.log(jnp.maximum(xs_neg, eps)))

    if gamma_neg > 0 or gamma_pos > 0:
        int_gammas = (float(gamma_neg).is_integer() and 0 <= gamma_neg <= 8 and
                      float(gamma_pos).is_integer() and 0 <= gamma_pos <= 8)
        if binary_targets:
            # base == 1 - xs_pos*y - xs_neg*(1-y) when y is binary.
            base = 1.0 - prob
            if int_gammas:
                w_neg = _int_pow(base, int(gamma_neg))
                if int(gamma_pos) == 0:
                    w = jnp.where(pos, 1.0, w_neg)   # torch.pow(., 0) == 1
                else:
                    w = jnp.where(pos, _int_pow(base, int(gamma_pos)), w_neg)
            else:
                w = jnp.power(base, jnp.where(pos, gamma_pos, gamma_neg))
        else:
            base = 1.0 - xs_pos * y - xs_neg * anti_y
            w = jnp.power(base, gamma_pos * y + gamma_neg * anti_y)
        loss = loss * w

    tb, c = loss.shape

    if need_row_mask:
        # Mask rows whose *nominal* global index is past B (partial tail block
        # and any duplicate/clamped block). Select -> NaN-safe for OOB garbage.
        row0 = (shard * steps + step) * block_rows
        rows = row0 + jax.lax.broadcasted_iota(jnp.int32, (tb, c), 0)
        loss = jnp.where(rows < num_rows, loss, 0.0)

    # Fold the (tb, C) tile into the resident (8, C) accumulator using only
    # elementwise VPU adds across sublane groups (no XLU reduce, no scalar store).
    out_ref[...] += loss.reshape(tb // 8, 8, c).sum(axis=0)


def asymmetric_loss(x, y, *, gamma_neg=4, gamma_pos=0, clip=0.05, eps=1e-8,
                    block_rows=None, num_shards=None,
                    assume_binary_targets=True, core_parallel_shards=False,
                    vmem_budget_bytes=None, target_step_bytes=8 << 20):
    """Scalar ASL loss -sum(loss), matching AsymmetricLossOptimized.forward.

    Set assume_binary_targets=False for soft labels (the fused single-log /
    select-based focal weight are only exact for y in {0,1}).
    Pass bf16 inputs straight through for ~2x HBM savings on v5e/v6e; do not
    cast in a separate wrapper op.
    """
    assert x.shape == y.shape and x.ndim == 2
    B, C = x.shape
    xb = jnp.dtype(x.dtype).itemsize
    yb = jnp.dtype(y.dtype).itemsize

    vmem_cap, n_cores = _tpu_caps()
    if vmem_budget_bytes is None:
        # ~24 MiB on v7x (64 MiB physical), ~48 MiB on v5e/v6e (128 MiB).
        vmem_budget_bytes = min((vmem_cap * 3) // 8, 48 << 20)

    # Batch sharding across TensorCores; 1 on single-core generations so the
    # second shard doesn't add round-up rows / a second accumulator slab.
    if num_shards is None:
        num_shards = n_cores
    num_shards = max(1, min(int(num_shards), max(1, B // 8)))

    # --- tile sizing (bytes-based, generation-aware) ---
    C_lane = _round_up(C, 128)                       # VMEM lane padding only
    in_bytes_per_row = C_lane * (xb + yb)            # one x+y tile row
    # 2x double-buffered input tiles + ~2x f32 intermediates (chain + reduce).
    work_bytes_per_row = 2 * in_bytes_per_row + 2 * C_lane * 4

    if block_rows is None:
        rows_step = max(8, target_step_bytes // max(in_bytes_per_row, 1))
        rows_vmem = max(8, (vmem_budget_bytes - (2 << 20)) // work_bytes_per_row)
        block_rows = min(rows_step, rows_vmem)
    block_rows = max(8, (int(block_rows) // 8) * 8)

    rows_per_shard = pl.cdiv(B, num_shards)
    block_rows = min(block_rows, _round_up(rows_per_shard, 8))
    steps = pl.cdiv(rows_per_shard, block_rows)
    # Shrink block_rows so per-shard over-coverage is bounded by ~8*steps rows
    # (instead of block_rows - 1), then re-derive steps.
    block_rows = max(8, _round_up(pl.cdiv(rows_per_shard, steps), 8))
    steps = pl.cdiv(rows_per_shard, block_rows)

    covered = num_shards * steps * block_rows        # nominal rows iterated
    need_row_mask = covered != B
    last_block = (B - 1) // block_rows               # last in-bounds block index

    def in_map(s, i):
        # Clamp so a block never starts past the last valid row; clamped
        # (duplicate) blocks are fully masked out inside the kernel.
        return (jnp.minimum(s * steps + i, last_block), 0)

    kernel = functools.partial(
        _asl_kernel,
        gamma_neg=float(gamma_neg),
        gamma_pos=float(gamma_pos),
        clip=clip,
        eps=float(eps),
        binary_targets=bool(assume_binary_targets),
        num_rows=B,
        block_rows=block_rows,
        steps=steps,
        need_row_mask=bool(need_row_mask),
    )

    # Explicit scoped-VMEM limit: double-buffered input tiles + f32 temporaries
    # + accumulator blocks + headroom, capped at the physical capacity.
    vmem_need = block_rows * work_bytes_per_row + 2 * 8 * C_lane * 4
    vmem_limit = int(min(max(32 << 20, vmem_need + (4 << 20)), vmem_cap))

    # TODO(synk): verify on v7x (xprof per-core timeline) that the shard axis
    # really lands on both TensorCores with plain "parallel"; opt into
    # CORE_PARALLEL via core_parallel_shards=True if it does not.
    shard_sem = (pltpu.CORE_PARALLEL
                 if (core_parallel_shards and num_shards > 1) else "parallel")

    partials = pl.pallas_call(
        kernel,
        out_shape=jax.ShapeDtypeStruct((num_shards, 8, C), jnp.float32),
        grid_spec=pltpu.PrefetchScalarGridSpec(
            num_scalar_prefetch=0,
            grid=(num_shards, steps),
            in_specs=[
                pl.BlockSpec((block_rows, C), in_map),
                pl.BlockSpec((block_rows, C), in_map),
            ],
            # Leading dim squeezed: kernel sees an (8, C) accumulator block.
            out_specs=pl.BlockSpec((None, 8, C), lambda s, i: (s, 0, 0)),
        ),
        compiler_params=pltpu.CompilerParams(
            dimension_semantics=(shard_sem, "arbitrary"),
            vmem_limit_bytes=vmem_limit,
        ),
    )(x, y)

    # Tiny final reduction over num_shards * 8 * C partials, plus the leading
    # minus sign of the reference (-loss.sum()).
    return -jnp.sum(partials)


def asymmetric_loss_ref(x, y, *, gamma_neg=4, gamma_pos=0, clip=0.05, eps=1e-8):
    """Pure-JAX reference mirroring the PyTorch forward.

    Note: disable_torch_grad_focal_loss only gates autograd in the original
    module; it has no effect on the forward value, so it is not modeled.
    """
    x = x.astype(jnp.float32)
    y = y.astype(jnp.float32)
    anti_y = 1.0 - y
    xs_pos = jax.nn.sigmoid(x)
    xs_neg = 1.0 - xs_pos
    if clip is not None and clip > 0:
        xs_neg = jnp.minimum(xs_neg + clip, 1.0)
    loss = y * jnp.log(jnp.maximum(xs_pos, eps))
    loss = loss + anti_y * jnp.log(jnp.maximum(xs_neg, eps))
    if gamma_neg > 0 or gamma_pos > 0:
        xp = xs_pos * y
        xn = xs_neg * anti_y
        w = jnp.power(1.0 - xp - xn, gamma_pos * y + gamma_neg * anti_y)
        loss = loss * w
    return -jnp.sum(loss)


if __name__ == "__main__":
    key = jax.random.PRNGKey(0)
    kx, ky, ks = jax.random.split(key, 3)

    # Small multi-label problem; C deliberately not a multiple of 128 and B not
    # a multiple of 8 to exercise the unpadded (full-extent C + row mask) path.
    B, C = 12, 100
    x = jax.random.normal(kx, (B, C), dtype=jnp.float32) * 2.0       # logits
    y = (jax.random.uniform(ky, (B, C)) < 0.25).astype(jnp.float32)  # binary targets

    out = asymmetric_loss(x, y)
    out = jax.block_until_ready(out)
    ref = asymmetric_loss_ref(x, y)
    assert jnp.allclose(out, ref, rtol=1e-4, atol=1e-3), (out, ref)

    # Secondary check: ragged rows across 2 shards + soft labels (general path).
    B2 = 20
    x2 = jax.random.normal(ks, (B2, C), dtype=jnp.float32) * 2.0
    y2 = jax.random.uniform(ky, (B2, C), dtype=jnp.float32)
    out2 = asymmetric_loss(x2, y2, num_shards=2, assume_binary_targets=False)
    out2 = jax.block_until_ready(out2)
    ref2 = asymmetric_loss_ref(x2, y2)
    assert jnp.allclose(out2, ref2, rtol=1e-4, atol=1e-3), (out2, ref2)

    print("KERNEL_OK")
</pallas_src>

<mosaic_0001>
module attributes {stable_mosaic.version = 11 : i64} {
  func.func @_asl_kernel(%arg0: i32, %arg1: i32, %arg2: memref<16x100xf32, #tpu.memory_space<vmem>>, %arg3: memref<16x100xf32, #tpu.memory_space<vmem>>, %arg4: memref<1x8x100xf32, #tpu.memory_space<vmem>>) attributes {dimension_semantics = [#tpu.dimension_semantics<parallel>, #tpu.dimension_semantics<arbitrary>], iteration_bounds = array<i64: 1, 1>, scalar_prefetch = 0 : i64, scratch_operands = 0 : i64, tpu.core_type = #tpu.core_type<tc>, window_params = [{transform_indices = @transform_0, window_bounds = array<i64: 16, 100>}, {transform_indices = @transform_1, window_bounds = array<i64: 16, 100>}, {transform_indices = @transform_2, window_bounds = array<i64: 1, 8, 100>}]} {
    %c0_i32 = arith.constant 0 : i32
    %0 = arith.cmpi eq, %arg1, %c0_i32 : i32
    %1 = arith.extui %0 : i1 to i32
    %c0_i32_0 = arith.constant 0 : i32
    %2 = arith.cmpi ne, %1, %c0_i32_0 : i32
    scf.if %2 {
      %cst_21 = arith.constant 0.000000e+00 : f32
      %49 = vector.broadcast %cst_21 : f32 to vector<8x100xf32>
      %c0_22 = arith.constant 0 : index
      %c0_23 = arith.constant 0 : index
      %c0_24 = arith.constant 0 : index
      %50 = vector.load %arg4[%c0_22, %c0_23, %c0_24] : memref<1x8x100xf32, #tpu.memory_space<vmem>>, vector<1x8x100xf32>
      %51 = vector.shape_cast %50 : vector<1x8x100xf32> to vector<8x100xf32>
      %52 = vector.shape_cast %49 : vector<8x100xf32> to vector<1x8x100xf32>
      tpu.vector_store %arg4[%c0_22, %c0_23, %c0_24], %52 {strides = array<i32>} : memref<1x8x100xf32, #tpu.memory_space<vmem>>, vector<1x8x100xf32>,
    } else {
    }
    %c0 = arith.constant 0 : index
    %c0_1 = arith.constant 0 : index
    %3 = vector.load %arg2[%c0, %c0_1] : memref<16x100xf32, #tpu.memory_space<vmem>>, vector<16x100xf32>
    %c0_2 = arith.constant 0 : index
    %c0_3 = arith.constant 0 : index
    %4 = vector.load %arg3[%c0_2, %c0_3] : memref<16x100xf32, #tpu.memory_space<vmem>>, vector<16x100xf32>
    %cst = arith.constant 5.000000e-01 : f32
    %5 = vector.broadcast %cst : f32 to vector<16x100xf32>
    %6 = arith.mulf %5, %3 : vector<16x100xf32>
    %7 = math.tanh %6 : vector<16x100xf32>
    %cst_4 = arith.constant 5.000000e-01 : f32
    %8 = vector.broadcast %cst_4 : f32 to vector<16x100xf32>
    %9 = arith.mulf %8, %7 : vector<16x100xf32>
    %cst_5 = arith.constant 5.000000e-01 : f32
    %10 = vector.broadcast %cst_5 : f32 to vector<16x100xf32>
    %11 = arith.addf %9, %10 : vector<16x100xf32>
    %cst_6 = arith.constant 1.000000e+00 : f32
    %12 = vector.broadcast %cst_6 : f32 to vector<16x100xf32>
    %13 = arith.subf %12, %11 : vector<16x100xf32>
    %cst_7 = arith.constant 5.000000e-02 : f32
    %14 = vector.broadcast %cst_7 : f32 to vector<16x100xf32>
    %15 = arith.addf %13, %14 : vector<16x100xf32>
    %cst_8 = arith.constant 1.000000e+00 : f32
    %16 = vector.broadcast %cst_8 : f32 to vector<16x100xf32>
    %17 = arith.minimumf %15, %16 : vector<16x100xf32>
    %cst_9 = arith.constant 5.000000e-01 : f32
    %18 = vector.broadcast %cst_9 : f32 to vector<16x100xf32>
    %19 = arith.cmpf ogt, %4, %18 : vector<16x100xf32>
    %20 = arith.select %19, %11, %17 : vector<16x100xi1>, vector<16x100xf32>
    %cst_10 = arith.constant 9.99999993E-9 : f32
    %21 = vector.broadcast %cst_10 : f32 to vector<16x100xf32>
    %22 = arith.maximumf %20, %21 : vector<16x100xf32>
    %23 = math.log %22 : vector<16x100xf32>
    %cst_11 = arith.constant 1.000000e+00 : f32
    %24 = vector.broadcast %cst_11 : f32 to vector<16x100xf32>
    %25 = arith.subf %24, %20 : vector<16x100xf32>
    %26 = arith.mulf %25, %25 : vector<16x100xf32>
    %27 = arith.mulf %26, %26 : vector<16x100xf32>
    %cst_12 = arith.constant 1.000000e+00 : f32
    %28 = vector.broadcast %cst_12 : f32 to vector<16x100xf32>
    %29 = arith.select %19, %28, %27 : vector<16x100xi1>, vector<16x100xf32>
    %30 = arith.mulf %23, %29 : vector<16x100xf32>
    %c1_i32 = arith.constant 1 : i32
    %31 = arith.muli %arg0, %c1_i32 : i32
    %32 = arith.addi %31, %arg1 : i32
    %c16_i32 = arith.constant 16 : i32
    %33 = arith.muli %32, %c16_i32 : i32
    %34 = tpu.iota {dimensions = array<i32: 0>} : vector<16x100xi32>
    %35 = vector.broadcast %33 : i32 to vector<16x100xi32>
    %36 = arith.addi %35, %34 : vector<16x100xi32>
    %c12_i32 = arith.constant 12 : i32
    %37 = vector.broadcast %c12_i32 : i32 to vector<16x100xi32>
    %38 = arith.cmpi slt, %36, %37 : vector<16x100xi32>
    %cst_13 = arith.constant 0.000000e+00 : f32
    %39 = vector.broadcast %cst_13 : f32 to vector<16x100xf32>
    %40 = arith.select %38, %30, %39 : vector<16x100xi1>, vector<16x100xf32>
    %c0_14 = arith.constant 0 : index
    %c0_15 = arith.constant 0 : index
    %c0_16 = arith.constant 0 : index
    %41 = vector.load %arg4[%c0_14, %c0_15, %c0_16] : memref<1x8x100xf32, #tpu.memory_space<vmem>>, vector<1x8x100xf32>
    %42 = vector.shape_cast %41 : vector<1x8x100xf32> to vector<8x100xf32>
    %43 = vector.shape_cast %40 : vector<16x100xf32> to vector<2x8x100xf32>
    %cst_17 = arith.constant dense<0.000000e+00> : vector<8x100xf32>
    %44 = vector.multi_reduction <add>, %43, %cst_17 [0] : vector<2x8x100xf32> to vector<8x100xf32>
    %45 = arith.addf %42, %44 : vector<8x100xf32>
    %c0_18 = arith.constant 0 : index
    %c0_19 = arith.constant 0 : index
    %c0_20 = arith.constant 0 : index
    %46 = vector.load %arg4[%c0_18, %c0_19, %c0_20] : memref<1x8x100xf32, #tpu.memory_space<vmem>>, vector<1x8x100xf32>
    %47 = vector.shape_cast %46 : vector<1x8x100xf32> to vector<8x100xf32>
    %48 = vector.shape_cast %45 : vector<8x100xf32> to vector<1x8x100xf32>
    tpu.vector_store %arg4[%c0_18, %c0_19, %c0_20], %48 {strides = array<i32>} : memref<1x8x100xf32, #tpu.memory_space<vmem>>, vector<1x8x100xf32>,
    return
  }
  func.func @transform_0(%arg0: i32, %arg1: i32) -> (i32, i32) {
    %c1_i32 = arith.constant 1 : i32
    %0 = arith.muli %arg0, %c1_i32 : i32
    %1 = arith.addi %0, %arg1 : i32
    %c0_i32 = arith.constant 0 : i32
    %2 = arith.minsi %1, %c0_i32 : i32
    %c0_i32_0 = arith.constant 0 : i32
    %c0_i32_1 = arith.constant 0 : i32
    return %2, %c0_i32_0 : i32, i32
  }
  func.func @transform_1(%arg0: i32, %arg1: i32) -> (i32, i32) {
    %c1_i32 = arith.constant 1 : i32
    %0 = arith.muli %arg0, %c1_i32 : i32
    %1 = arith.addi %0, %arg1 : i32
    %c0_i32 = arith.constant 0 : i32
    %2 = arith.minsi %1, %c0_i32 : i32
    %c0_i32_0 = arith.constant 0 : i32
    %c0_i32_1 = arith.constant 0 : i32
    return %2, %c0_i32_0 : i32, i32
  }
  func.func @transform_2(%arg0: i32, %arg1: i32) -> (i32, i32, i32) {
    %c0_i32 = arith.constant 0 : i32
    %c0_i32_0 = arith.constant 0 : i32
    %c0_i32_1 = arith.constant 0 : i32
    return %arg0, %c0_i32, %c0_i32_0 : i32, i32, i32
  }
}

</mosaic_0001>

<llo_original>
// kernel: tpu_custom_call.1
$region0: #{tpu_custom_call.1}
  #allocation0 [shape = 'u32[]', space=smem, size = 0x4, offset = 0x4, fixed_abs, tag = 'smem constant byte address 0x4 - core index']
  #allocation1 [shape = 'u32[144,128]{1,0:T(1,128)}', space=vmem, size = 0x12000, scoped, tag = 'internal scratch']
  %s0 = inlined_call_operand.hbm [shape: f32[12,100], index: 0, kind: input, shape index: {}]
  %s1 = inlined_call_operand.hbm [shape: f32[12,100], index: 1, kind: input, shape index: {}]
  %s2 = inlined_call_operand.hbm [shape: f32[1,8,100], index: 2, kind: output, shape index: {}]
  %s3 = sld [smem:[#allocation0]]
  $region30: #{tpu_custom_call.1} parent=0
    _
  %s5 = ssub.s32 1, %s3
  %s6 = scalar_select 0, %s5, %s3
  $region1: #{tpu_custom_call.1} parent=0
    #allocation2 [shape = 'u8[8192]{0}', space=vmem, size = 0x2000, scoped, tag = 'input window, operand 0, single buffered']
    #allocation3 [shape = 's32[1]{0}', space=sflag, size = 0x4, scoped, tag = 'scoped memory for tpu_custom_call.1']
    #allocation4 [shape = 's32[1]{0}', space=sflag, size = 0x4, scoped, tag = 'scoped memory for tpu_custom_call.1']
    #allocation5 [shape = 'u8[8192]{0}', space=vmem, size = 0x2000, scoped, tag = 'input window, operand 1, single buffered']
    #allocation6 [shape = 's32[1]{0}', space=sflag, size = 0x4, scoped, tag = 'scoped memory for tpu_custom_call.1']
    #allocation7 [shape = 'u8[4096]{0}', space=vmem, size = 0x1000, scoped, tag = 'output window, operand 0, single buffered']
    %7 = vsyncpa [#allocation3], 0
    %8 = vsyncpa [#allocation6], 0
    %9 = vsyncpa [#allocation4], 0
    // Predicated region
    $region2: #{tpu_custom_call.1} parent=1 // pred_check
      _
    $region3: #{tpu_custom_call.1} parent=1 // pred_check_branch
      %11 = sbr.rel (0) target = $region5
    $region4: #{tpu_custom_call.1} parent=1 // pred_region
      %s12 = sadd.s32 0, 0
      %p13 = scmp.lt.s32.totalorder %s12, 0
      %s14 = scalar_select %p13, %s12, 0
      %s15 = smul.u32 2, %s14
      %s17 = ssub.s32 256, 256
      %18 = vsyncadd [#allocation3], %s17
      %s19 = smul.addr %s15, 128
      %s20 = scalar_lea.hbm %s0, %s19
      %s21 = sshll.u32 [#allocation2], 4
      %s22 = int_to_ptr.vmem [resolvable:$true] %s21
      %27 = dma.hbm_to_vmem [thread:$0]  %s20, 256, %s22, [#allocation3], 128, 128, 8
    $region5: #{tpu_custom_call.1} parent=1 // pred_fallthru
      _
    // Predicated region
    $region6: #{tpu_custom_call.1} parent=1 // pred_check
      _
    $region7: #{tpu_custom_call.1} parent=1 // pred_check_branch
      %29 = sbr.rel (0) target = $region9
    $region8: #{tpu_custom_call.1} parent=1 // pred_region
      %s30 = sadd.s32 0, 0
      %p31 = scmp.lt.s32.totalorder %s30, 0
      %s32 = scalar_select %p31, %s30, 0
      %s33 = smul.u32 2, %s32
      %s35 = ssub.s32 256, 256
      %36 = vsyncadd [#allocation6], %s35
      %s37 = smul.addr %s33, 128
      %s38 = scalar_lea.hbm %s1, %s37
      %s39 = sshll.u32 [#allocation5], 4
      %s40 = int_to_ptr.vmem [resolvable:$true] %s39
      %45 = dma.hbm_to_vmem [thread:$0]  %s38, 256, %s40, [#allocation6], 128, 128, 8
    $region9: #{tpu_custom_call.1} parent=1 // pred_fallthru
      _
    // Predicated region
    $region10: #{tpu_custom_call.1} parent=1 // pred_check
      _
    $region11: #{tpu_custom_call.1} parent=1 // pred_check_branch
      %47 = sbr.rel (0) target = $region13
    $region12: #{tpu_custom_call.1} parent=1 // pred_region
      %48 = dma.done [#allocation3], 256
    $region13: #{tpu_custom_call.1} parent=1 // pred_fallthru
      _
    // Predicated region
    $region14: #{tpu_custom_call.1} parent=1 // pred_check
      _
    $region15: #{tpu_custom_call.1} parent=1 // pred_check_branch
      %50 = sbr.rel (0) target = $region17
    $region16: #{tpu_custom_call.1} parent=1 // pred_region
      %51 = dma.done [#allocation6], 256
    $region17: #{tpu_custom_call.1} parent=1 // pred_fallthru
      _
    %s52 = sadd.s32 0, 0
    %p53 = scmp.lt.s32.totalorder %s52, 0
    %s54 = scalar_select %p53, %s52, 0
    %s55 = smul.u32 2, %s54
    %s56 = sadd.s32 0, 0
    %p57 = scmp.lt.s32.totalorder %s56, 0
    %s58 = scalar_select %p57, %s56, 0
    %s59 = smul.u32 2, %s58
    %p60 = scmp.eq.s32.totalorder 0, 0
    // Predicated region
    $region18: #{tpu_custom_call.1} parent=1 // pred_check
      %p61 = pneg %p60
    $region19: #{tpu_custom_call.1} parent=1 // pred_check_branch
      %63 = sbr.rel (%p61) target = $region21
    $region20: #{tpu_custom_call.1} parent=1 // pred_region
      %vm64 = vcmask 818176
      %65 = vst.msk [vmem:[#allocation7] sm:$0xff] %vm64, 0.0
    $region21: #{tpu_custom_call.1} parent=1 // pred_fallthru
      _
    %v66 = vld [vmem:[#allocation2] sm:$0xff]
    %v67 = vld [vmem:[#allocation2 + $0x8] sm:$0xff]
    %v68 = vld [vmem:[#allocation5] sm:$0xff]
    %v69 = vld [vmem:[#allocation5 + $0x8] sm:$0xff]
    %v70 = vmul.f32 %v66, 0.5
    %v71 = vmul.f32 %v67, 0.5
    %v72 = vtanh.pop %v70
    %v73 = vtanh.pop %v71
    %v74 = vmul.f32 %v72, 0.5
    %v75 = vmul.f32 %v73, 0.5
    %v76 = vadd.f32 %v74, 0.5
    %v77 = vadd.f32 %v75, 0.5
    %v78 = vsub.f32 1.0, %v76
    %v79 = vsub.f32 1.0, %v77
    %v80 = vadd.f32 %v78, 0.05
    %v81 = vadd.f32 %v79, 0.05
    %v82 = vmin.f32 %v80, 1.0
    %v83 = vmin.f32 %v81, 1.0
    %vm84 = vcmp.gt.f32.partialorder %v68, 0.5
    %vm85 = vcmp.gt.f32.partialorder %v69, 0.5
    %v86 = vsel %vm84, %v76, %v82
    %v87 = vsel %vm85, %v77, %v83
    %v88 = vmax.f32 %v86, 1e-08
    %v89 = vmax.f32 %v87, 1e-08
    %v90 = vlog2.pop %v88
    %v91 = vmul.f32 %v90, 0.6931472
    %v92 = vlog2.pop %v89
    %v93 = vmul.f32 %v92, 0.6931472
    %v94 = vsub.f32 1.0, %v86
    %v95 = vsub.f32 1.0, %v87
    %v96 = vmul.f32 %v94, %v94
    %v97 = vmul.f32 %v95, %v95
    %v98 = vmul.f32 %v96, %v96
    %v99 = vmul.f32 %v97, %v97
    %v100 = vsel %vm84, 1.0, %v98
    %v101 = vsel %vm85, 1.0, %v99
    %v102 = vmul.f32 %v91, %v100
    %v103 = vmul.f32 %v93, %v101
    %s104 = sadd.s32 0, 0
    %s105 = smul.u32 %s104, 16
    %v106 = vlaneseq
    %v107 = vshrl.u32 %v106, 7
    %v108 = vadd.s32 %v107, 8
    %v109 = vstv %s105
    %v110 = vadd.s32 %v109, %v107
    %v111 = vadd.s32 %v109, %v108
    %vm112 = vcmp.lt.s32.totalorder %v110, 12
    %vm113 = vcmp.lt.s32.totalorder %v111, 12
    %v114 = vsel %vm112, %v102, 0.0
    %v115 = vsel %vm113, %v103, 0.0
    %v116 = vld [vmem:[#allocation7] sm:$0xff]
    %vm117 = vcmask 818176
    %v118 = vsel %vm117, %v114, 0.0
    %v119 = vsel %vm117, %v115, 0.0
    %v120 = vadd.f32 %v118, %v119
    %v121 = vadd.f32 %v116, %v120
    %122 = vst.msk [vmem:[#allocation7] sm:$0xff] %vm117, %v121
    // Predicated region
    $region22: #{tpu_custom_call.1} parent=1 // pred_check
      _
    $region23: #{tpu_custom_call.1} parent=1 // pred_check_branch
      %124 = sbr.rel (0) target = $region25
    $region24: #{tpu_custom_call.1} parent=1 // pred_region
      %s126 = ssub.s32 128, 128
      %127 = vsyncadd [#allocation4], %s126
      %s129 = sshll.u32 [#allocation7], 4
      %s130 = int_to_ptr.vmem [resolvable:$true] %s129
      %132 = dma.vmem_to_hbm [thread:$0]  %s130, 128, %s2, [#allocation4]
    $region25: #{tpu_custom_call.1} parent=1 // pred_fallthru
      _
    // Predicated region
    $region26: #{tpu_custom_call.1} parent=1 // pred_check
      _
    $region27: #{tpu_custom_call.1} parent=1 // pred_check_branch
      %134 = sbr.rel (0) target = $region29
    $region28: #{tpu_custom_call.1} parent=1 // pred_region
      %135 = dma.done [#allocation4], 128
    $region29: #{tpu_custom_call.1} parent=1 // pred_fallthru
      _
    %136 = vsyncpa [#allocation3], 1
    %137 = vsyncpa [#allocation6], 1
    %138 = vsyncpa [#allocation4], 1

</llo_original>
